<compile_context>
chip_gen: v6e
topology: v6e:2x2x1
jax: 0.10.0
libtpu: 0.0.40
codegen_flags: <defaults>
</compile_context>

<pallas_src>
import functools

import jax
import jax.numpy as jnp
from jax.experimental import pallas as pl
from jax.experimental.pallas import tpu as pltpu


def _round_up(x, m):
    return (x + m - 1) // m * m


def _cdiv(a, b):
    return (a + b - 1) // b


def _dice_partial_kernel(yt_ref, yp_ref, top_ref, bot_ref, *,
                         rows, vox, vox_tile, n_chunks, n_k, needs_mask):
    # yt_ref / yp_ref : (rows, vox_tile) native-dtype input tiles.
    # top_ref / bot_ref: (rows, 128) f32 lane-dense accumulator slabs, resident
    # across the voxel (reduction) grid axis; one slab per split.
    s = pl.program_id(0)
    k = pl.program_id(1)

    if needs_mask:
        # Logical (unclamped) element offset of this tile along the voxel axis.
        vstart = (s * n_k + k) * vox_tile
        col = jax.lax.broadcasted_iota(jnp.int32, (rows, 128), 1)

    def body(j, carry):
        t_acc, b_acc = carry
        off = pl.multiple_of(j * 128, 128)
        t = yt_ref[:, pl.ds(off, 128)].astype(jnp.float32)
        p = yp_ref[:, pl.ds(off, 128)].astype(jnp.float32)
        if needs_mask:
            valid = (vstart + off + col) < vox
            t = jnp.where(valid, t, 0.0)
            p = jnp.where(valid, p, 0.0)
        return t_acc + t * p, b_acc + (t + p)

    zero = jnp.zeros((rows, 128), jnp.float32)
    t_acc, b_acc = jax.lax.fori_loop(0, n_chunks, body, (zero, zero),
                                     unroll=min(8, n_chunks))

    @pl.when(k == 0)
    def _():
        top_ref[...] = t_acc
        bot_ref[...] = b_acc

    @pl.when(k != 0)
    def _():
        top_ref[...] += t_acc
        bot_ref[...] += b_acc


def voxelmorph_seg_loss(y_true, y_pred, *, vox_tile=None, n_splits=None):
    """Equivalent of VoxelMorphSegLoss().forward(y_true, y_pred).

    y_true, y_pred: (N, C, *spatial) arrays (any float dtype, NCHW-like).
    Returns a scalar float32: -mean over (N, C) of the soft Dice coefficient.
    """
    assert y_true.shape == y_pred.shape, (y_true.shape, y_pred.shape)
    n, c = int(y_true.shape[0]), int(y_true.shape[1])
    rows = n * c
    vox = 1
    for d in y_true.shape[2:]:
        vox *= int(d)

    # Stream native dtypes; cast to f32 only inside the kernel.
    it_t = jnp.dtype(y_true.dtype).itemsize
    it_p = jnp.dtype(y_pred.dtype).itemsize
    itemsize = max(it_t, it_p)

    vox_128 = _round_up(vox, 128)
    if vox_tile is None:
        # ~4 MiB per input tile: amortizes per-grid-step overhead on v7x while
        # total live VMEM (2 inputs x 2 buffers + slabs) stays well under 32 MiB.
        budget = 4 * 1024 * 1024
        vt = (budget // max(rows * itemsize, 1)) // 128 * 128
        vox_tile = int(max(128, min(vt, vox_128)))
    else:
        vox_tile = int(min(_round_up(int(vox_tile), 128), vox_128))
    n_chunks = vox_tile // 128

    n_blocks = _cdiv(vox, vox_tile)
    if n_splits is None:
        n_splits = 2 if n_blocks >= 2 else 1   # use both TCs on v7x
    n_splits = int(max(1, min(int(n_splits), n_blocks)))
    n_k = _cdiv(n_blocks, n_splits)

    # Mask only when the tail tile is ragged or a split has clamped/duplicate
    # logical blocks; otherwise the mask code is never emitted.
    needs_mask = (vox % vox_tile != 0) or (n_splits * n_k != n_blocks)

    yt2 = jnp.reshape(y_true, (rows, vox))   # metadata-only reshape, no copy
    yp2 = jnp.reshape(y_pred, (rows, vox))

    def in_index_map(s, k):
        # Clamp logical block index into range; out-of-range (duplicate) blocks
        # are fully masked inside the kernel so they contribute zero.
        return (0, jnp.minimum(s * n_k + k, n_blocks - 1))

    in_spec = pl.BlockSpec((rows, vox_tile), in_index_map)
    out_spec = pl.BlockSpec((None, rows, 128), lambda s, k: (s, 0, 0))

    kernel = functools.partial(
        _dice_partial_kernel, rows=rows, vox=vox, vox_tile=vox_tile,
        n_chunks=n_chunks, n_k=n_k, needs_mask=needs_mask)

    # Right-size the VMEM limit from actual usage (+ slack for Mosaic scratch).
    in_tile_bytes = rows * vox_tile * itemsize
    out_block_bytes = rows * 128 * 4
    vmem_limit = 2 * 2 * in_tile_bytes + 2 * 2 * out_block_bytes + 6 * 1024 * 1024
    vmem_limit = int(min(max(vmem_limit, 12 * 1024 * 1024), 40 * 1024 * 1024))

    top, bot = pl.pallas_call(
        kernel,
        out_shape=(jax.ShapeDtypeStruct((n_splits, rows, 128), jnp.float32),
                   jax.ShapeDtypeStruct((n_splits, rows, 128), jnp.float32)),
        grid=(n_splits, n_k),
        in_specs=[in_spec, in_spec],
        out_specs=(out_spec, out_spec),
        compiler_params=pltpu.CompilerParams(
            dimension_semantics=("parallel", "arbitrary"),
            vmem_limit_bytes=vmem_limit),
    )(yt2, yp2)

    # Finalize: fold splits + lanes, clamp, divide, mean — tiny, stays in JAX.
    top_r = 2.0 * jnp.sum(top, axis=(0, 2))                 # (rows,)
    bot_r = jnp.maximum(jnp.sum(bot, axis=(0, 2)), 1e-5)    # (rows,)
    return -jnp.mean(top_r / bot_r)


def _dice_loss_ref(y_true, y_pred):
    # pure-JAX reference of the VoxelMorph dice loss
    axes = tuple(range(2, y_pred.ndim))
    yt = y_true.astype(jnp.float32)
    yp = y_pred.astype(jnp.float32)
    top = 2.0 * jnp.sum(yt * yp, axis=axes)
    bottom = jnp.maximum(jnp.sum(yt + yp, axis=axes), 1e-5)
    return -jnp.mean(top / bottom)


if __name__ == "__main__":
    key = jax.random.PRNGKey(0)
    k1, k2, k3, k4 = jax.random.split(key, 4)

    # --- check 1: small NCHW f32; single block, single split, no masking ---
    shape = (2, 4, 16, 16)
    y_true = jax.nn.softmax(jax.random.normal(k1, shape, jnp.float32), axis=1)
    y_pred = jax.nn.softmax(jax.random.normal(k2, shape, jnp.float32), axis=1)
    loss = jax.block_until_ready(voxelmorph_seg_loss(y_true, y_pred))
    ref = _dice_loss_ref(y_true, y_pred)
    assert jnp.allclose(loss, ref, atol=2e-5, rtol=2e-5), (loss, ref)

    # --- check 2: ragged voxel count (rows=12, vox=960) + forced small tiles
    #     -> 2-way split parallel grid + in-kernel tail masking, NO padding ---
    shape2 = (2, 6, 24, 40)
    yt = jax.nn.softmax(jax.random.normal(k3, shape2, jnp.float32), axis=1)
    yp = jax.nn.softmax(jax.random.normal(k4, shape2, jnp.float32), axis=1)
    ref2 = _dice_loss_ref(yt, yp)
    loss2 = jax.block_until_ready(voxelmorph_seg_loss(yt, yp, vox_tile=256))
    assert jnp.allclose(loss2, ref2, atol=2e-5, rtol=2e-5), (loss2, ref2)

    # --- check 3: tile choice leaving a clamped (fully out-of-range) logical
    #     block on the second split -> exercises index clamping + full mask ---
    loss3 = jax.block_until_ready(voxelmorph_seg_loss(yt, yp, vox_tile=384))
    assert jnp.allclose(loss3, ref2, atol=2e-5, rtol=2e-5), (loss3, ref2)

    # --- check 4: native bf16 inputs (no wrapper upcast), block wider than the
    #     voxel extent (960 -> one 1024-lane tile), f32 accumulation ---
    yt_b = yt.astype(jnp.bfloat16)
    yp_b = yp.astype(jnp.bfloat16)
    loss4 = jax.block_until_ready(voxelmorph_seg_loss(yt_b, yp_b))
    ref4 = _dice_loss_ref(yt_b, yp_b)
    assert jnp.allclose(loss4, ref4, atol=1e-4, rtol=1e-4), (loss4, ref4)

    print("KERNEL_OK")
</pallas_src>

<mosaic_0001>
module attributes {stable_mosaic.version = 11 : i64} {
  func.func @_dice_partial_kernel(%arg0: i32, %arg1: i32, %arg2: memref<8x256xf32, #tpu.memory_space<vmem>>, %arg3: memref<8x256xf32, #tpu.memory_space<vmem>>, %arg4: memref<1x8x128xf32, #tpu.memory_space<vmem>>, %arg5: memref<1x8x128xf32, #tpu.memory_space<vmem>>) attributes {dimension_semantics = [#tpu.dimension_semantics<parallel>, #tpu.dimension_semantics<arbitrary>], iteration_bounds = array<i64: 1, 1>, scalar_prefetch = 0 : i64, scratch_operands = 0 : i64, tpu.core_type = #tpu.core_type<tc>, window_params = [{transform_indices = @transform_0, window_bounds = array<i64: 8, 256>}, {transform_indices = @transform_1, window_bounds = array<i64: 8, 256>}, {transform_indices = @transform_2, window_bounds = array<i64: 1, 8, 128>}, {transform_indices = @transform_3, window_bounds = array<i64: 1, 8, 128>}]} {
    %cst = arith.constant 0.000000e+00 : f32
    %0 = vector.broadcast %cst : f32 to vector<8x128xf32>
    %c0_i32 = arith.constant 0 : i32
    %c128_i32 = arith.constant 128 : i32
    %1 = arith.muli %c0_i32, %c128_i32 : i32
    %2 = tpu.assume_multiple %1, 128 : i32
    %c0 = arith.constant 0 : index
    %3 = arith.index_cast %2 : i32 to index
    %4 = vector.load %arg2[%c0, %3] : memref<8x256xf32, #tpu.memory_space<vmem>>, vector<8x128xf32>
    %c0_0 = arith.constant 0 : index
    %5 = arith.index_cast %2 : i32 to index
    %6 = vector.load %arg3[%c0_0, %5] : memref<8x256xf32, #tpu.memory_space<vmem>>, vector<8x128xf32>
    %7 = arith.mulf %4, %6 : vector<8x128xf32>
    %8 = arith.addf %0, %7 : vector<8x128xf32>
    %9 = arith.addf %4, %6 : vector<8x128xf32>
    %10 = arith.addf %0, %9 : vector<8x128xf32>
    %c1_i32 = arith.constant 1 : i32
    %c128_i32_1 = arith.constant 128 : i32
    %11 = arith.muli %c1_i32, %c128_i32_1 : i32
    %12 = tpu.assume_multiple %11, 128 : i32
    %c0_2 = arith.constant 0 : index
    %13 = arith.index_cast %12 : i32 to index
    %14 = vector.load %arg2[%c0_2, %13] : memref<8x256xf32, #tpu.memory_space<vmem>>, vector<8x128xf32>
    %c0_3 = arith.constant 0 : index
    %15 = arith.index_cast %12 : i32 to index
    %16 = vector.load %arg3[%c0_3, %15] : memref<8x256xf32, #tpu.memory_space<vmem>>, vector<8x128xf32>
    %17 = arith.mulf %14, %16 : vector<8x128xf32>
    %18 = arith.addf %8, %17 : vector<8x128xf32>
    %19 = arith.addf %14, %16 : vector<8x128xf32>
    %20 = arith.addf %10, %19 : vector<8x128xf32>
    %c2_i32 = arith.constant 2 : i32
    %c0_i32_4 = arith.constant 0 : i32
    %21 = arith.cmpi eq, %arg1, %c0_i32_4 : i32
    %22 = arith.extui %21 : i1 to i32
    %c0_i32_5 = arith.constant 0 : i32
    %23 = arith.cmpi ne, %22, %c0_i32_5 : i32
    scf.if %23 {
      %c0_8 = arith.constant 0 : index
      %c0_9 = arith.constant 0 : index
      %c0_10 = arith.constant 0 : index
      %27 = vector.load %arg4[%c0_8, %c0_9, %c0_10] : memref<1x8x128xf32, #tpu.memory_space<vmem>>, vector<1x8x128xf32>
      %28 = vector.shape_cast %27 : vector<1x8x128xf32> to vector<8x128xf32>
      %29 = vector.shape_cast %18 : vector<8x128xf32> to vector<1x8x128xf32>
      tpu.vector_store %arg4[%c0_8, %c0_9, %c0_10], %29 {strides = array<i32>} : memref<1x8x128xf32, #tpu.memory_space<vmem>>, vector<1x8x128xf32>,
      %c0_11 = arith.constant 0 : index
      %c0_12 = arith.constant 0 : index
      %c0_13 = arith.constant 0 : index
      %30 = vector.load %arg5[%c0_11, %c0_12, %c0_13] : memref<1x8x128xf32, #tpu.memory_space<vmem>>, vector<1x8x128xf32>
      %31 = vector.shape_cast %30 : vector<1x8x128xf32> to vector<8x128xf32>
      %32 = vector.shape_cast %20 : vector<8x128xf32> to vector<1x8x128xf32>
      tpu.vector_store %arg5[%c0_11, %c0_12, %c0_13], %32 {strides = array<i32>} : memref<1x8x128xf32, #tpu.memory_space<vmem>>, vector<1x8x128xf32>,
    } else {
    }
    %c0_i32_6 = arith.constant 0 : i32
    %24 = arith.cmpi ne, %arg1, %c0_i32_6 : i32
    %25 = arith.extui %24 : i1 to i32
    %c0_i32_7 = arith.constant 0 : i32
    %26 = arith.cmpi ne, %25, %c0_i32_7 : i32
    scf.if %26 {
      %c0_8 = arith.constant 0 : index
      %c0_9 = arith.constant 0 : index
      %c0_10 = arith.constant 0 : index
      %27 = vector.load %arg4[%c0_8, %c0_9, %c0_10] : memref<1x8x128xf32, #tpu.memory_space<vmem>>, vector<1x8x128xf32>
      %28 = vector.shape_cast %27 : vector<1x8x128xf32> to vector<8x128xf32>
      %29 = arith.addf %28, %18 : vector<8x128xf32>
      %c0_11 = arith.constant 0 : index
      %c0_12 = arith.constant 0 : index
      %c0_13 = arith.constant 0 : index
      %30 = vector.load %arg4[%c0_11, %c0_12, %c0_13] : memref<1x8x128xf32, #tpu.memory_space<vmem>>, vector<1x8x128xf32>
      %31 = vector.shape_cast %30 : vector<1x8x128xf32> to vector<8x128xf32>
      %32 = vector.shape_cast %29 : vector<8x128xf32> to vector<1x8x128xf32>
      tpu.vector_store %arg4[%c0_11, %c0_12, %c0_13], %32 {strides = array<i32>} : memref<1x8x128xf32, #tpu.memory_space<vmem>>, vector<1x8x128xf32>,
      %c0_14 = arith.constant 0 : index
      %c0_15 = arith.constant 0 : index
      %c0_16 = arith.constant 0 : index
      %33 = vector.load %arg5[%c0_14, %c0_15, %c0_16] : memref<1x8x128xf32, #tpu.memory_space<vmem>>, vector<1x8x128xf32>
      %34 = vector.shape_cast %33 : vector<1x8x128xf32> to vector<8x128xf32>
      %35 = arith.addf %34, %20 : vector<8x128xf32>
      %c0_17 = arith.constant 0 : index
      %c0_18 = arith.constant 0 : index
      %c0_19 = arith.constant 0 : index
      %36 = vector.load %arg5[%c0_17, %c0_18, %c0_19] : memref<1x8x128xf32, #tpu.memory_space<vmem>>, vector<1x8x128xf32>
      %37 = vector.shape_cast %36 : vector<1x8x128xf32> to vector<8x128xf32>
      %38 = vector.shape_cast %35 : vector<8x128xf32> to vector<1x8x128xf32>
      tpu.vector_store %arg5[%c0_17, %c0_18, %c0_19], %38 {strides = array<i32>} : memref<1x8x128xf32, #tpu.memory_space<vmem>>, vector<1x8x128xf32>,
    } else {
    }
    return
  }
  func.func @transform_0(%arg0: i32, %arg1: i32) -> (i32, i32) {
    %c1_i32 = arith.constant 1 : i32
    %0 = arith.muli %arg0, %c1_i32 : i32
    %1 = arith.addi %0, %arg1 : i32
    %c0_i32 = arith.constant 0 : i32
    %2 = arith.minsi %1, %c0_i32 : i32
    %c0_i32_0 = arith.constant 0 : i32
    %c0_i32_1 = arith.constant 0 : i32
    return %c0_i32_0, %2 : i32, i32
  }
  func.func @transform_1(%arg0: i32, %arg1: i32) -> (i32, i32) {
    %c1_i32 = arith.constant 1 : i32
    %0 = arith.muli %arg0, %c1_i32 : i32
    %1 = arith.addi %0, %arg1 : i32
    %c0_i32 = arith.constant 0 : i32
    %2 = arith.minsi %1, %c0_i32 : i32
    %c0_i32_0 = arith.constant 0 : i32
    %c0_i32_1 = arith.constant 0 : i32
    return %c0_i32_0, %2 : i32, i32
  }
  func.func @transform_2(%arg0: i32, %arg1: i32) -> (i32, i32, i32) {
    %c0_i32 = arith.constant 0 : i32
    %c0_i32_0 = arith.constant 0 : i32
    %c0_i32_1 = arith.constant 0 : i32
    return %arg0, %c0_i32, %c0_i32_0 : i32, i32, i32
  }
  func.func @transform_3(%arg0: i32, %arg1: i32) -> (i32, i32, i32) {
    %c0_i32 = arith.constant 0 : i32
    %c0_i32_0 = arith.constant 0 : i32
    %c0_i32_1 = arith.constant 0 : i32
    return %arg0, %c0_i32, %c0_i32_0 : i32, i32, i32
  }
}

</mosaic_0001>

<llo_original>
// kernel: tpu_custom_call.1
$region0: #{tpu_custom_call.1}
  #allocation0 [shape = 'u32[]', space=smem, size = 0x4, offset = 0x4, fixed_abs, tag = 'smem constant byte address 0x4 - core index']
  #allocation1 [shape = 'u32[144,128]{1,0:T(1,128)}', space=vmem, size = 0x12000, scoped, tag = 'internal scratch']
  %s0 = inlined_call_operand.hbm [shape: f32[8,256], index: 0, kind: input, shape index: {}]
  %s1 = inlined_call_operand.hbm [shape: f32[8,256], index: 1, kind: input, shape index: {}]
  %s2 = inlined_call_operand.hbm [shape: f32[1,8,128], index: 2, kind: output, shape index: {0}]
  %s3 = inlined_call_operand.hbm [shape: f32[1,8,128], index: 3, kind: output, shape index: {1}]
  %4 = xla_tuple %s2, %s3
  %s5 = sld [smem:[#allocation0]]
  $region42: #{tpu_custom_call.1} parent=0
    _
  %s7 = ssub.s32 1, %s5
  %s8 = scalar_select 0, %s7, %s5
  $region1: #{tpu_custom_call.1} parent=0
    #allocation2 [shape = 'u8[8192]{0}', space=vmem, size = 0x2000, scoped, tag = 'input window, operand 0, single buffered']
    #allocation3 [shape = 's32[1]{0}', space=sflag, size = 0x4, scoped, tag = 'scoped memory for tpu_custom_call.1']
    #allocation4 [shape = 's32[1]{0}', space=sflag, size = 0x4, scoped, tag = 'scoped memory for tpu_custom_call.1']
    #allocation5 [shape = 'u8[8192]{0}', space=vmem, size = 0x2000, scoped, tag = 'input window, operand 1, single buffered']
    #allocation6 [shape = 's32[1]{0}', space=sflag, size = 0x4, scoped, tag = 'scoped memory for tpu_custom_call.1']
    #allocation7 [shape = 'u8[4096]{0}', space=vmem, size = 0x1000, scoped, tag = 'output window, operand 0, single buffered']
    #allocation8 [shape = 'u8[4096]{0}', space=vmem, size = 0x1000, scoped, tag = 'output window, operand 1, single buffered']
    #allocation9 [shape = 's32[1]{0}', space=sflag, size = 0x4, scoped, tag = 'scoped memory for tpu_custom_call.1']
    %9 = vsyncpa [#allocation3], 0
    %10 = vsyncpa [#allocation6], 0
    %11 = vsyncpa [#allocation4], 0
    %12 = vsyncpa [#allocation9], 0
    // Predicated region
    $region2: #{tpu_custom_call.1} parent=1 // pred_check
      _
    $region3: #{tpu_custom_call.1} parent=1 // pred_check_branch
      %14 = sbr.rel (0) target = $region5
    $region4: #{tpu_custom_call.1} parent=1 // pred_region
      %s15 = sadd.s32 0, 0
      %p16 = scmp.lt.s32.totalorder %s15, 0
      %s17 = scalar_select %p16, %s15, 0
      %s18 = smul.u32 2, %s17
      %s20 = ssub.s32 256, 256
      %21 = vsyncadd [#allocation3], %s20
      %s22 = smul.addr %s18, 128
      %s23 = scalar_lea.hbm %s0, %s22
      %s25 = sshll.u32 [#allocation2], 4
      %s26 = int_to_ptr.vmem [resolvable:$true] %s25
      %28 = dma.hbm_to_vmem [thread:$0]  %s23, 256, %s26, [#allocation3]
    $region5: #{tpu_custom_call.1} parent=1 // pred_fallthru
      _
    // Predicated region
    $region6: #{tpu_custom_call.1} parent=1 // pred_check
      _
    $region7: #{tpu_custom_call.1} parent=1 // pred_check_branch
      %30 = sbr.rel (0) target = $region9
    $region8: #{tpu_custom_call.1} parent=1 // pred_region
      %s31 = sadd.s32 0, 0
      %p32 = scmp.lt.s32.totalorder %s31, 0
      %s33 = scalar_select %p32, %s31, 0
      %s34 = smul.u32 2, %s33
      %s36 = ssub.s32 256, 256
      %37 = vsyncadd [#allocation6], %s36
      %s38 = smul.addr %s34, 128
      %s39 = scalar_lea.hbm %s1, %s38
      %s41 = sshll.u32 [#allocation5], 4
      %s42 = int_to_ptr.vmem [resolvable:$true] %s41
      %44 = dma.hbm_to_vmem [thread:$0]  %s39, 256, %s42, [#allocation6]
    $region9: #{tpu_custom_call.1} parent=1 // pred_fallthru
      _
    // Predicated region
    $region10: #{tpu_custom_call.1} parent=1 // pred_check
      _
    $region11: #{tpu_custom_call.1} parent=1 // pred_check_branch
      %46 = sbr.rel (0) target = $region13
    $region12: #{tpu_custom_call.1} parent=1 // pred_region
      %47 = dma.done [#allocation3], 256
    $region13: #{tpu_custom_call.1} parent=1 // pred_fallthru
      _
    // Predicated region
    $region14: #{tpu_custom_call.1} parent=1 // pred_check
      _
    $region15: #{tpu_custom_call.1} parent=1 // pred_check_branch
      %49 = sbr.rel (0) target = $region17
    $region16: #{tpu_custom_call.1} parent=1 // pred_region
      %50 = dma.done [#allocation6], 256
    $region17: #{tpu_custom_call.1} parent=1 // pred_fallthru
      _
    %s51 = sadd.s32 0, 0
    %p52 = scmp.lt.s32.totalorder %s51, 0
    %s53 = scalar_select %p52, %s51, 0
    %s54 = smul.u32 2, %s53
    %s55 = sadd.s32 0, 0
    %p56 = scmp.lt.s32.totalorder %s55, 0
    %s57 = scalar_select %p56, %s55, 0
    %s58 = smul.u32 2, %s57
    %v59 = vld [vmem:[#allocation2] sm:$0xff]
    %v60 = vld [vmem:[#allocation5] sm:$0xff]
    %v61 = vmul.f32 %v59, %v60
    %v62 = vadd.f32 %v61, 0.0
    %v63 = vadd.f32 %v59, %v60
    %v64 = vadd.f32 %v63, 0.0
    %s65 = scalar_lea.vmem [#allocation2], 8
    %v66 = vld [vmem:[%s65] sm:$0xff]
    %s67 = scalar_lea.vmem [#allocation5], 8
    %v68 = vld [vmem:[%s67] sm:$0xff]
    %v69 = vmul.f32 %v66, %v68
    %v70 = vadd.f32 %v62, %v69
    %v71 = vadd.f32 %v66, %v68
    %v72 = vadd.f32 %v64, %v71
    %p73 = scmp.eq.s32.totalorder 0, 0
    // Predicated region
    $region18: #{tpu_custom_call.1} parent=1 // pred_check
      %p74 = pneg %p73
    $region19: #{tpu_custom_call.1} parent=1 // pred_check_branch
      %76 = sbr.rel (%p74) target = $region21
    $region20: #{tpu_custom_call.1} parent=1 // pred_region
      %77 = vst [vmem:[#allocation7] sm:$0xff] %v70
      %78 = vst [vmem:[#allocation8] sm:$0xff] %v72
    $region21: #{tpu_custom_call.1} parent=1 // pred_fallthru
      _
    %p79 = scmp.ne.s32.totalorder 0, 0
    // Predicated region
    $region22: #{tpu_custom_call.1} parent=1 // pred_check
      %p80 = pneg %p79
    $region23: #{tpu_custom_call.1} parent=1 // pred_check_branch
      %82 = sbr.rel (%p80) target = $region25
    $region24: #{tpu_custom_call.1} parent=1 // pred_region
      %v83 = vld [vmem:[#allocation7] sm:$0xff]
      %v84 = vadd.f32 %v83, %v70
      %85 = vst [vmem:[#allocation7] sm:$0xff] %v84
      %v86 = vld [vmem:[#allocation8] sm:$0xff]
      %v87 = vadd.f32 %v86, %v72
      %88 = vst [vmem:[#allocation8] sm:$0xff] %v87
    $region25: #{tpu_custom_call.1} parent=1 // pred_fallthru
      _
    // Predicated region
    $region26: #{tpu_custom_call.1} parent=1 // pred_check
      _
    $region27: #{tpu_custom_call.1} parent=1 // pred_check_branch
      %90 = sbr.rel (0) target = $region29
    $region28: #{tpu_custom_call.1} parent=1 // pred_region
      %s92 = ssub.s32 128, 128
      %93 = vsyncadd [#allocation4], %s92
      %s95 = sshll.u32 [#allocation7], 4
      %s96 = int_to_ptr.vmem [resolvable:$true] %s95
      %98 = dma.vmem_to_hbm [thread:$0]  %s96, 128, %s2, [#allocation4]
    $region29: #{tpu_custom_call.1} parent=1 // pred_fallthru
      _
    // Predicated region
    $region30: #{tpu_custom_call.1} parent=1 // pred_check
      _
    $region31: #{tpu_custom_call.1} parent=1 // pred_check_branch
      %100 = sbr.rel (0) target = $region33
    $region32: #{tpu_custom_call.1} parent=1 // pred_region
      %s102 = ssub.s32 128, 128
      %103 = vsyncadd [#allocation9], %s102
      %s105 = sshll.u32 [#allocation8], 4
      %s106 = int_to_ptr.vmem [resolvable:$true] %s105
      %108 = dma.vmem_to_hbm [thread:$0]  %s106, 128, %s3, [#allocation9]
    $region33: #{tpu_custom_call.1} parent=1 // pred_fallthru
      _
    // Predicated region
    $region34: #{tpu_custom_call.1} parent=1 // pred_check
      _
    $region35: #{tpu_custom_call.1} parent=1 // pred_check_branch
      %110 = sbr.rel (0) target = $region37
    $region36: #{tpu_custom_call.1} parent=1 // pred_region
      %111 = dma.done [#allocation4], 128
    $region37: #{tpu_custom_call.1} parent=1 // pred_fallthru
      _
    // Predicated region
    $region38: #{tpu_custom_call.1} parent=1 // pred_check
      _
    $region39: #{tpu_custom_call.1} parent=1 // pred_check_branch
      %113 = sbr.rel (0) target = $region41
    $region40: #{tpu_custom_call.1} parent=1 // pred_region
      %114 = dma.done [#allocation9], 128
    $region41: #{tpu_custom_call.1} parent=1 // pred_fallthru
      _
    %115 = vsyncpa [#allocation3], 1
    %116 = vsyncpa [#allocation6], 1
    %117 = vsyncpa [#allocation4], 1
    %118 = vsyncpa [#allocation9], 1

</llo_original>
